<compile_context>
chip_gen: v7x
topology: tpu7x:2x2x1
jax: 0.10.0
libtpu: 0.0.40
codegen_flags: <defaults>
</compile_context>

<pallas_src>
import functools

import jax
import jax.numpy as jnp
from jax.experimental import pallas as pl
from jax.experimental.pallas import tpu as pltpu

_LANE = 128
_MIN_TILE = 512                       # below this, per-step overhead dominates
_TARGET_BLOCK_BYTES = (3 * 1024 * 1024) // 2   # ~1.5 MiB per (C, tile) input block


def _round_up(x: int, m: int) -> int:
    return ((x + m - 1) // m) * m


def _vmem_capacity_bytes() -> int:
    """Physical VMEM per TensorCore; conservative 64 MiB (v7x) fallback."""
    try:
        info = pltpu.get_tpu_info()
        for name in ("vmem_capacity_bytes", "vmem_size_bytes", "vmem_bytes"):
            cap = getattr(info, name, None)
            if cap:
                return int(cap)
    except Exception:
        pass
    return 64 * 1024 * 1024


def _layernorm2d_kernel(x_ref, w_ref, b_ref, o_ref, *, eps):
    # x_ref: (C, T)   w_ref/b_ref: (C, 1)   o_ref: (C, T)
    x = x_ref[...].astype(jnp.float32)                 # (C, T)
    u = jnp.mean(x, axis=0, keepdims=True)             # (1, T) mean over channels
    d = x - u
    s = jnp.mean(d * d, axis=0, keepdims=True)         # (1, T) biased variance
    inv = jax.lax.rsqrt(s + eps)                       # EUP rsqrt
    w = w_ref[...].astype(jnp.float32)                 # (C, 1) broadcasts over T
    b = b_ref[...].astype(jnp.float32)
    o_ref[...] = (d * inv * w + b).astype(o_ref.dtype)


def layernorm2d(x, weight, bias, eps: float = 1e-6, *, max_lane_tile: int | None = None):
    """x: (N, C, H, W).  weight, bias: (C,).  Returns (N, C, H, W)."""
    N, C, H, W = x.shape
    HW = H * W
    itemsize = jnp.dtype(x.dtype).itemsize
    vmem_cap = _vmem_capacity_bytes()

    # ---- lane-tile selection: ~1.5 MiB blocks, capped by the VMEM budget ----
    if HW <= _LANE:
        # Full spatial extent as a single (full-dim) block; no 128-multiple needed.
        tile = HW
    else:
        hw_pad = _round_up(HW, _LANE)
        tile = _round_up(max(1, _TARGET_BLOCK_BYTES // max(1, C * itemsize)), _LANE)
        tile = max(tile, _MIN_TILE)
        # Double-buffered in + out blocks ~= 4 * C * tile * itemsize; keep <=60% of VMEM.
        budget = int(vmem_cap * 0.6)
        max_tile = max(_LANE, (budget // max(1, 4 * C * itemsize)) // _LANE * _LANE)
        tile = min(tile, max_tile, hw_pad)
        if max_lane_tile is not None:
            tile = min(tile, max(_LANE, _round_up(max_lane_tile, _LANE)))
        tile = max(tile, _LANE)

    grid = (N, pl.cdiv(HW, tile))

    x3 = x.reshape(N, C, HW)            # contiguous view: free reshape
    w2 = weight.reshape(C, 1)
    b2 = bias.reshape(C, 1)

    # Explicit scoped-VMEM limit: cover double-buffered in+out blocks with headroom,
    # but never exceed ~75% of the physical per-core capacity (v7x-safe).
    w_itemsize = jnp.dtype(weight.dtype).itemsize
    per_step = 4 * C * tile * itemsize + 4 * C * w_itemsize + (1 << 20)
    vmem_limit = int(min(0.75 * vmem_cap, max(2 * per_step, 32 * 1024 * 1024)))

    cost = pl.CostEstimate(
        flops=7 * N * C * HW,
        transcendentals=N * HW,                         # one rsqrt per spatial column
        bytes_accessed=2 * N * C * HW * itemsize + 2 * C * w_itemsize,
    )

    kernel = functools.partial(_layernorm2d_kernel, eps=eps)

    out = pl.pallas_call(
        kernel,
        out_shape=jax.ShapeDtypeStruct((N, C, HW), x.dtype),
        grid_spec=pltpu.PrefetchScalarGridSpec(
            num_scalar_prefetch=0,
            grid=grid,
            in_specs=[
                # Leading N dim squeezed: kernel sees (C, tile).
                pl.BlockSpec((None, C, tile), lambda n, t: (n, 0, t)),
                # weight/bias: same block every step -> DMA'd once.
                pl.BlockSpec((C, 1), lambda n, t: (0, 0)),
                pl.BlockSpec((C, 1), lambda n, t: (0, 0)),
            ],
            out_specs=pl.BlockSpec((None, C, tile), lambda n, t: (n, 0, t)),
        ),
        compiler_params=pltpu.CompilerParams(
            dimension_semantics=("parallel", "parallel"),
            vmem_limit_bytes=vmem_limit,
        ),
        cost_estimate=cost,
    )(x3, w2, b2)

    return out.reshape(N, C, H, W)


def _reference(x, weight, bias, eps=1e-6):
    u = x.mean(axis=1, keepdims=True)
    s = ((x - u) ** 2).mean(axis=1, keepdims=True)
    xn = (x - u) / jnp.sqrt(s + eps)
    return weight[None, :, None, None] * xn + bias[None, :, None, None]


if __name__ == "__main__":
    key = jax.random.PRNGKey(0)
    k1, k2, k3, k4 = jax.random.split(key, 4)

    # Case 1: module-default params (ones / zeros), HW a multiple of 128.
    N, C, H, W = 2, 4, 16, 16
    x = jax.random.normal(k1, (N, C, H, W), dtype=jnp.float32)
    weight = jnp.ones((C,), dtype=jnp.float32)
    bias = jnp.zeros((C,), dtype=jnp.float32)

    out = jax.block_until_ready(layernorm2d(x, weight, bias))
    ref = _reference(x, weight, bias)
    assert out.shape == (N, C, H, W)
    assert jnp.allclose(out, ref, atol=1e-5, rtol=1e-5), "mismatch vs reference (case 1)"

    # Case 2: non-trivial affine params, HW < 128 (single full-extent block).
    N2, C2, H2, W2 = 2, 4, 10, 10
    x2 = jax.random.normal(k2, (N2, C2, H2, W2), dtype=jnp.float32)
    w2 = 1.0 + 0.1 * jax.random.normal(k3, (C2,), dtype=jnp.float32)
    b2 = 0.1 * jnp.arange(C2, dtype=jnp.float32)

    out2 = jax.block_until_ready(layernorm2d(x2, w2, b2))
    ref2 = _reference(x2, w2, b2)
    assert out2.shape == (N2, C2, H2, W2)
    assert jnp.allclose(out2, ref2, atol=1e-5, rtol=1e-5), "mismatch vs reference (case 2)"

    # Case 3: HW not a multiple of the lane tile -> exercises the in-kernel
    # ragged-last-tile path (Pallas edge-block padding + discarded OOB lanes).
    N3, C3, H3, W3 = 2, 8, 6, 25          # HW = 150, forced tile = 128 -> 2 spatial tiles
    x3 = jax.random.normal(k4, (N3, C3, H3, W3), dtype=jnp.float32)
    w3 = 1.0 + 0.05 * jnp.arange(C3, dtype=jnp.float32)
    b3 = -0.2 + 0.1 * jnp.arange(C3, dtype=jnp.float32)

    out3 = jax.block_until_ready(layernorm2d(x3, w3, b3, max_lane_tile=128))
    ref3 = _reference(x3, w3, b3)
    assert out3.shape == (N3, C3, H3, W3)
    assert jnp.allclose(out3, ref3, atol=1e-5, rtol=1e-5), "mismatch vs reference (case 3)"

    print("KERNEL_OK")
</pallas_src>

<mosaic_0001>
module attributes {stable_mosaic.version = 11 : i64} {
  func.func @_layernorm2d_kernel(%arg0: i32, %arg1: i32, %arg2: memref<1x4x256xf32, #tpu.memory_space<vmem>>, %arg3: memref<4x1xf32, #tpu.memory_space<vmem>>, %arg4: memref<4x1xf32, #tpu.memory_space<vmem>>, %arg5: memref<1x4x256xf32, #tpu.memory_space<vmem>>) attributes {dimension_semantics = [#tpu.dimension_semantics<parallel>, #tpu.dimension_semantics<parallel>], iteration_bounds = array<i64: 2, 1>, scalar_prefetch = 0 : i64, scratch_operands = 0 : i64, tpu.core_type = #tpu.core_type<tc>, window_params = [{transform_indices = @transform_0, window_bounds = array<i64: 1, 4, 256>}, {pipeline_mode = #tpu.pipeline_mode<synchronous>, transform_indices = @transform_1, window_bounds = array<i64: 4, 1>}, {pipeline_mode = #tpu.pipeline_mode<synchronous>, transform_indices = @transform_2, window_bounds = array<i64: 4, 1>}, {transform_indices = @transform_3, window_bounds = array<i64: 1, 4, 256>}]} {
    %c0 = arith.constant 0 : index
    %c0_0 = arith.constant 0 : index
    %c0_1 = arith.constant 0 : index
    %0 = vector.load %arg2[%c0, %c0_0, %c0_1] : memref<1x4x256xf32, #tpu.memory_space<vmem>>, vector<1x4x256xf32>
    %1 = vector.shape_cast %0 : vector<1x4x256xf32> to vector<4x256xf32>
    %cst = arith.constant dense<0.000000e+00> : vector<256xf32>
    %2 = vector.multi_reduction <add>, %1, %cst [0] : vector<4x256xf32> to vector<256xf32>
    %3 = vector.shape_cast %2 : vector<256xf32> to vector<1x256xf32>
    %cst_2 = arith.constant 4.000000e+00 : f32
    %4 = vector.broadcast %cst_2 : f32 to vector<1x256xf32>
    %5 = arith.divf %3, %4 : vector<1x256xf32>
    %6 = vector.broadcast %5 : vector<1x256xf32> to vector<4x256xf32>
    %7 = arith.subf %1, %6 : vector<4x256xf32>
    %8 = arith.mulf %7, %7 : vector<4x256xf32>
    %cst_3 = arith.constant dense<0.000000e+00> : vector<256xf32>
    %9 = vector.multi_reduction <add>, %8, %cst_3 [0] : vector<4x256xf32> to vector<256xf32>
    %10 = vector.shape_cast %9 : vector<256xf32> to vector<1x256xf32>
    %cst_4 = arith.constant 4.000000e+00 : f32
    %11 = vector.broadcast %cst_4 : f32 to vector<1x256xf32>
    %12 = arith.divf %10, %11 : vector<1x256xf32>
    %cst_5 = arith.constant 9.99999997E-7 : f32
    %13 = vector.broadcast %cst_5 : f32 to vector<1x256xf32>
    %14 = arith.addf %12, %13 : vector<1x256xf32>
    %15 = math.rsqrt %14 : vector<1x256xf32>
    %c0_6 = arith.constant 0 : index
    %c0_7 = arith.constant 0 : index
    %16 = vector.load %arg3[%c0_6, %c0_7] : memref<4x1xf32, #tpu.memory_space<vmem>>, vector<4x1xf32>
    %c0_8 = arith.constant 0 : index
    %c0_9 = arith.constant 0 : index
    %17 = vector.load %arg4[%c0_8, %c0_9] : memref<4x1xf32, #tpu.memory_space<vmem>>, vector<4x1xf32>
    %18 = vector.broadcast %15 : vector<1x256xf32> to vector<4x256xf32>
    %19 = arith.mulf %7, %18 : vector<4x256xf32>
    %20 = vector.broadcast %16 : vector<4x1xf32> to vector<4x256xf32>
    %21 = arith.mulf %19, %20 : vector<4x256xf32>
    %22 = vector.broadcast %17 : vector<4x1xf32> to vector<4x256xf32>
    %23 = arith.addf %21, %22 : vector<4x256xf32>
    %c0_10 = arith.constant 0 : index
    %c0_11 = arith.constant 0 : index
    %c0_12 = arith.constant 0 : index
    %24 = vector.load %arg5[%c0_10, %c0_11, %c0_12] : memref<1x4x256xf32, #tpu.memory_space<vmem>>, vector<1x4x256xf32>
    %25 = vector.shape_cast %24 : vector<1x4x256xf32> to vector<4x256xf32>
    %26 = vector.shape_cast %23 : vector<4x256xf32> to vector<1x4x256xf32>
    tpu.vector_store %arg5[%c0_10, %c0_11, %c0_12], %26 {strides = array<i32>} : memref<1x4x256xf32, #tpu.memory_space<vmem>>, vector<1x4x256xf32>,
    return
  }
  func.func @transform_0(%arg0: i32, %arg1: i32) -> (i32, i32, i32) {
    %c0_i32 = arith.constant 0 : i32
    %c0_i32_0 = arith.constant 0 : i32
    return %arg0, %c0_i32, %arg1 : i32, i32, i32
  }
  func.func @transform_1(%arg0: i32, %arg1: i32) -> (i32, i32) {
    %c0_i32 = arith.constant 0 : i32
    %c0_i32_0 = arith.constant 0 : i32
    %c0_i32_1 = arith.constant 0 : i32
    return %c0_i32, %c0_i32_0 : i32, i32
  }
  func.func @transform_2(%arg0: i32, %arg1: i32) -> (i32, i32) {
    %c0_i32 = arith.constant 0 : i32
    %c0_i32_0 = arith.constant 0 : i32
    %c0_i32_1 = arith.constant 0 : i32
    return %c0_i32, %c0_i32_0 : i32, i32
  }
  func.func @transform_3(%arg0: i32, %arg1: i32) -> (i32, i32, i32) {
    %c0_i32 = arith.constant 0 : i32
    %c0_i32_0 = arith.constant 0 : i32
    return %arg0, %c0_i32, %arg1 : i32, i32, i32
  }
}

</mosaic_0001>

<llo_original>
// kernel: tpu_custom_call.1
$region0: #{tpu_custom_call.1}
  #allocation0 [shape = 'u32[]', space=smem, size = 0x4, offset = 0x4, fixed_abs, tag = 'smem constant byte address 0x4 - core index']
  #allocation1 [shape = 'u32[144,128]{1,0:T(1,128)}', space=vmem, size = 0x12000, scoped, tag = 'internal scratch']
  %s0 = inlined_call_operand.hbm [shape: f32[2,4,256], index: 0, kind: input, shape index: {}]
  %s1 = inlined_call_operand.vmem [shape: f32[4,1], index: 1, kind: input, shape index: {}]
  %s2 = inlined_call_operand.vmem [shape: f32[4,1], index: 2, kind: input, shape index: {}]
  %s3 = inlined_call_operand.hbm [shape: f32[2,4,256], index: 3, kind: output, shape index: {}]
  %s4 = sld [smem:[#allocation0]]
  $region49: #{tpu_custom_call.1} parent=0
    _
  %s6 = ssub.s32 1, %s4
  %s7 = scalar_select 0, %s6, %s4
  $region1: #{tpu_custom_call.1} parent=0
    #allocation2 [shape = 'u8[8192]{0}', space=vmem, size = 0x2000, scoped, tag = 'input window, operand 0']
    #allocation3 [shape = 's32[2]{0}', space=sflag, size = 0x8, scoped, tag = 'scoped memory for tpu_custom_call.1']
    #allocation4 [shape = 's32[2]{0}', space=sflag, size = 0x8, scoped, tag = 'scoped memory for tpu_custom_call.1']
    #allocation5 [shape = 'u8[8192]{0}', space=vmem, size = 0x2000, scoped, tag = 'output window, operand 0']
    %8 = vsyncpa [#allocation3], 0
    %s9 = scalar_lea.sflag [#allocation3], 1
    %10 = vsyncpa %s9, 0
    %11 = vsyncpa [#allocation4], 0
    %s12 = scalar_lea.sflag [#allocation4], 1
    %13 = vsyncpa %s12, 0
    loop: start=0, step=1, limit=4
    $region2: #{tpu_custom_call.1} parent=1 // loop_pre_header
      _
    $region3: #{tpu_custom_call.1} parent=1 // loop_header
      %s15 = sphi 0, %s19
      %p16 = scmp.ge.s32.totalorder %s15, 4
      %s22 = sphi 0, %s34
      %s23 = sphi 0, %s30
      %s24 = sphi 0, %s22
      %s25 = sphi 0, %s23
      %s26 = sphi 0, %s24
      %s27 = sphi 0, %s25
      %s39 = sphi 0, %s41
      %s42 = sphi 0, %s39
      %s43 = sphi 0, %s42
      %s59 = sphi 0, %s43
      %s63 = sphi 0, %s63
      %s65 = sphi 0, %s63
      %s66 = sphi 0, %s65
      %s80 = sphi 0, %s66
      %s84 = sphi 0, %s84
      %s86 = sphi 0, %s84
      %s87 = sphi 0, %s86
      %s101 = sphi 0, %s87
      %s109 = sphi 0, %s111
      %s112 = sphi 0, %s109
      %s113 = sphi 0, %s112
      %s129 = sphi 0, %s113
    $region4: #{tpu_custom_call.1} parent=1 // loop_header_branch
      %18 = sbr.rel (%p16) target = $region8
    $region5: #{tpu_custom_call.1} parent=1 // loop_body
      %s20 = ssub.s32 %s15, 1
      %s21 = ssub.s32 %s15, 2
      %s28 = sadd.s32 1, %s23
      %p29 = scmp.ge.s32.totalorder %s28, 1
      %s30 = scalar_select %p29, 0, %s28
      %s31 = sadd.s32 1, %s22
      %s32 = scalar_select %p29, %s31, %s22
      %p33 = scmp.ge.s32.totalorder %s32, 2
      %s34 = scalar_select %p33, 0, %s32
      %s35 = ssub.s32 %s22, %s34
      %s36 = ssub.s32 %s23, %s30
      %s37 = sor.u32 %s35, %s36
      %p38 = scmp.eq.s32.totalorder %s37, 0
      %s40 = sadd.s32 %s39, 1
      %s41 = scalar_select %p38, %s39, %s40
      %p44 = pneg %p38
      %p45 = scmp.eq.s32.totalorder %s15, 1
      %p46 = por %p44, %p45
      %p47 = scmp.ne.s32.totalorder %s39, %s42
      %p48 = scmp.eq.s32.totalorder %s15, 0
      %p49 = por %p47, %p48
      %p50 = scmp.ne.s32.totalorder %s39, %s42
      %p51 = scmp.eq.s32.totalorder %s20, 1
      %p52 = por %p50, %p51
      %p53 = scmp.ne.s32.totalorder %s42, %s43
      %p54 = scmp.eq.s32.totalorder %s20, 0
      %p55 = por %p53, %p54
      %p56 = scmp.ne.s32.totalorder %s42, %s43
      %p57 = scmp.eq.s32.totalorder %s21, 1
      %p58 = por %p56, %p57
      %p60 = scmp.ne.s32.totalorder %s43, %s59
      %p61 = scmp.eq.s32.totalorder %s21, 0
      %p62 = por %p60, %p61
      %s64 = sadd.s32 %s63, 1
      %p67 = scmp.eq.s32.totalorder %s15, 1
      %p68 = scmp.ne.s32.totalorder %s63, %s65
      %p69 = scmp.eq.s32.totalorder %s15, 0
      %p70 = por %p68, %p69
      %p71 = scmp.ne.s32.totalorder %s63, %s65
      %p72 = scmp.eq.s32.totalorder %s20, 1
      %p73 = por %p71, %p72
      %p74 = scmp.ne.s32.totalorder %s65, %s66
      %p75 = scmp.eq.s32.totalorder %s20, 0
      %p76 = por %p74, %p75
      %p77 = scmp.ne.s32.totalorder %s65, %s66
      %p78 = scmp.eq.s32.totalorder %s21, 1
      %p79 = por %p77, %p78
      %p81 = scmp.ne.s32.totalorder %s66, %s80
      %p82 = scmp.eq.s32.totalorder %s21, 0
      %p83 = por %p81, %p82
      %s85 = sadd.s32 %s84, 1
      %p88 = scmp.eq.s32.totalorder %s15, 1
      %p89 = scmp.ne.s32.totalorder %s84, %s86
      %p90 = scmp.eq.s32.totalorder %s15, 0
      %p91 = por %p89, %p90
      %p92 = scmp.ne.s32.totalorder %s84, %s86
      %p93 = scmp.eq.s32.totalorder %s20, 1
      %p94 = por %p92, %p93
      %p95 = scmp.ne.s32.totalorder %s86, %s87
      %p96 = scmp.eq.s32.totalorder %s20, 0
      %p97 = por %p95, %p96
      %p98 = scmp.ne.s32.totalorder %s86, %s87
      %p99 = scmp.eq.s32.totalorder %s21, 1
      %p100 = por %p98, %p99
      %p102 = scmp.ne.s32.totalorder %s87, %s101
      %p103 = scmp.eq.s32.totalorder %s21, 0
      %p104 = por %p102, %p103
      %s105 = ssub.s32 %s22, %s34
      %s106 = ssub.s32 %s23, %s30
      %s107 = sor.u32 %s105, %s106
      %p108 = scmp.eq.s32.totalorder %s107, 0
      %s110 = sadd.s32 %s109, 1
      %s111 = scalar_select %p108, %s109, %s110
      %p114 = pneg %p108
      %p115 = scmp.eq.s32.totalorder %s15, 1
      %p116 = por %p114, %p115
      %p117 = scmp.ne.s32.totalorder %s109, %s112
      %p118 = scmp.eq.s32.totalorder %s15, 0
      %p119 = por %p117, %p118
      %p120 = scmp.ne.s32.totalorder %s109, %s112
      %p121 = scmp.eq.s32.totalorder %s20, 1
      %p122 = por %p120, %p121
      %p123 = scmp.ne.s32.totalorder %s112, %s113
      %p124 = scmp.eq.s32.totalorder %s20, 0
      %p125 = por %p123, %p124
      %p126 = scmp.ne.s32.totalorder %s112, %s113
      %p127 = scmp.eq.s32.totalorder %s21, 1
      %p128 = por %p126, %p127
      %p130 = scmp.ne.s32.totalorder %s113, %s129
      %p131 = scmp.eq.s32.totalorder %s21, 0
      %p132 = por %p130, %p131
      %p133 = scmp.le.s32.totalorder 1, %s15
      %p134 = scmp.lt.s32.totalorder %s15, 3
      %p135 = pnand %p133, %p134
      %p136 = pneg %p135
      // Predicated region
      $region9: #{tpu_custom_call.1} parent=5 // pred_check
        _
      $region10: #{tpu_custom_call.1} parent=5 // pred_check_branch
        %138 = sbr.rel (%p135) target = $region12
      $region11: #{tpu_custom_call.1} parent=5 // pred_region
        %s139 = ssub.s32 %s15, 1
        // Predicated region
        $region13: #{tpu_custom_call.1} parent=11 // pred_check
          %p140 = pneg %p76
        $region14: #{tpu_custom_call.1} parent=11 // pred_check_branch
          %142 = sbr.rel (%p140) target = $region16
        $region15: #{tpu_custom_call.1} parent=11 // pred_region
          _
        $region16: #{tpu_custom_call.1} parent=11 // pred_fallthru
          _
        // Predicated region
        $region17: #{tpu_custom_call.1} parent=11 // pred_check
          %p143 = pneg %p97
        $region18: #{tpu_custom_call.1} parent=11 // pred_check_branch
          %145 = sbr.rel (%p143) target = $region20
        $region19: #{tpu_custom_call.1} parent=11 // pred_region
          _
        $region20: #{tpu_custom_call.1} parent=11 // pred_fallthru
          _
      $region12: #{tpu_custom_call.1} parent=5 // pred_fallthru
        _
      %p146 = scmp.lt.s32.totalorder %s15, 2
      // Predicated region
      $region21: #{tpu_custom_call.1} parent=5 // pred_check
        %p147 = pneg %p146
      $region22: #{tpu_custom_call.1} parent=5 // pred_check_branch
        %149 = sbr.rel (%p147) target = $region24
      $region23: #{tpu_custom_call.1} parent=5 // pred_region
        // Predicated region
        $region25: #{tpu_custom_call.1} parent=23 // pred_check
          %p150 = pneg %p49
        $region26: #{tpu_custom_call.1} parent=23 // pred_check_branch
          %152 = sbr.rel (%p150) target = $region28
        $region27: #{tpu_custom_call.1} parent=23 // pred_region
          %s153 = sand.u32 %s39, 1
          %s154 = scalar_lea.sflag [#allocation3], %s153
          %s155 = sand.u32 %s39, 1
          %s156 = smul.addr %s155, 8
          %s157 = scalar_lea.vmem [#allocation2], %s156
          %s158 = smul.u32 2, %s23
          %s160 = ssub.s32 128, 128
          %161 = vsyncadd %s154, %s160
          %s162 = smul.addr %s22, 2
          %s163 = sadd.s32 %s158, %s162
          %s164 = smul.addr %s163, 64
          %s165 = scalar_lea.hbm %s0, %s164
          %s167 = sshll.u32 %s157, 4
          %s168 = int_to_ptr.vmem [resolvable:$true] %s167
          %170 = dma.hbm_to_vmem [thread:$0]  %s165, 128, %s168, %s154
        $region28: #{tpu_custom_call.1} parent=23 // pred_fallthru
          _
      $region24: #{tpu_custom_call.1} parent=5 // pred_fallthru
        _
      %p171 = scmp.le.s32.totalorder 1, %s15
      %p172 = scmp.lt.s32.totalorder %s15, 3
      %p173 = pnand %p171, %p172
      %p174 = pneg %p173
      // Predicated region
      $region29: #{tpu_custom_call.1} parent=5 // pred_check
        _
      $region30: #{tpu_custom_call.1} parent=5 // pred_check_branch
        %176 = sbr.rel (%p173) target = $region32
      $region31: #{tpu_custom_call.1} parent=5 // pred_region
        %s177 = ssub.s32 %s15, 1
        %s178 = sand.u32 %s42, 1
        %s179 = scalar_lea.sflag [#allocation3], %s178
        %s180 = sand.u32 %s42, 1
        %s181 = smul.addr %s180, 8
        %s182 = scalar_lea.vmem [#allocation2], %s181
        // Predicated region
        $region33: #{tpu_custom_call.1} parent=31 // pred_check
          %p183 = pneg %p55
        $region34: #{tpu_custom_call.1} parent=31 // pred_check_branch
          %185 = sbr.rel (%p183) target = $region36
        $region35: #{tpu_custom_call.1} parent=31 // pred_region
          %186 = dma.done %s179, 128
        $region36: #{tpu_custom_call.1} parent=31 // pred_fallthru
          _
        %s187 = sand.u32 %s42, 1
        %s188 = scalar_lea.sflag [#allocation3], %s187
        %s189 = sand.u32 %s42, 1
        %s190 = smul.addr %s189, 8
        %s191 = scalar_lea.vmem [#allocation2], %s190
        %p192 = pneg %p55
        %p193 = pneg %p52
        %p194 = pneg %p76
        %p195 = pneg %p73
        %p196 = pneg %p97
        %p197 = pneg %p94
        %p198 = pneg %p125
        %p199 = pneg %p122
        %s200 = sand.u32 %s112, 1
        %s201 = scalar_lea.sflag [#allocation4], %s200
        %s202 = sand.u32 %s112, 1
        %s203 = smul.addr %s202, 8
        %s204 = scalar_lea.vmem [#allocation5], %s203
        %s205 = smul.u32 2, %s25
        %s206 = smul.u32 2, %s25
        %v207 = vld [vmem:[%s182] sm:$0xff]
        %v209 = vcombine.high %v207, %v207
        %vm211 = vcmask 1043456
        %v212 = vsel %vm211, %v207, 0.0
        %v213 = vrot.slane %v212, 4
        %v214 = vadd.f32 %v212, %v213
        %v215 = vrot.slane %v214, 2
        %v216 = vadd.f32 %v214, %v215
        %v217 = vrot.slane %v216, 1
        %v218 = vadd.f32 %v216, %v217
        %v219 = vsel %vm211, %v209, 0.0
        %v220 = vrot.slane %v219, 4
        %v221 = vadd.f32 %v219, %v220
        %v222 = vrot.slane %v221, 2
        %v223 = vadd.f32 %v221, %v222
        %v224 = vrot.slane %v223, 1
        %v225 = vadd.f32 %v223, %v224
        %v226 = vrcp.pop 4.0
        %v227 = vmul.f32 %v218, %v226
        %v228 = vmul.f32 %v225, %v226
        %v231 = vcombine.low %v227, %v228
        %v233 = vsub.f32 %v207, %v231
        %v234 = vmul.f32 %v233, %v233
        %v236 = vcombine.high %v234, %v234
        %v238 = vsel %vm211, %v234, 0.0
        %v239 = vrot.slane %v238, 4
        %v240 = vadd.f32 %v238, %v239
        %v241 = vrot.slane %v240, 2
        %v242 = vadd.f32 %v240, %v241
        %v243 = vrot.slane %v242, 1
        %v244 = vadd.f32 %v242, %v243
        %v245 = vsel %vm211, %v236, 0.0
        %v246 = vrot.slane %v245, 4
        %v247 = vadd.f32 %v245, %v246
        %v248 = vrot.slane %v247, 2
        %v249 = vadd.f32 %v247, %v248
        %v250 = vrot.slane %v249, 1
        %v251 = vadd.f32 %v249, %v250
        %v252 = vmul.f32 %v244, %v226
        %v253 = vmul.f32 %v251, %v226
        %v254 = vadd.f32 %v252, 1e-06
        %v255 = vadd.f32 %v253, 1e-06
        %v256 = vrsqrt.pop %v254
        %v257 = vrsqrt.pop %v255
        %v258 = vld [vmem:[%s1] sm:$0xf]
        %v259 = vld [vmem:[%s2] sm:$0xf]
        %v262 = vcombine.low %v256, %v257
        %v264 = vmul.f32 %v233, %v262
        %266 = vset.pattern.permute.xlu0 0
        %267 = vperm.xlu0 %266, %v258
        %v268 = vpop.permute.xlu0 %267
        %v270 = vunpack.c.l.s4 839922192
        %v271 = vunpack.c.0.s8 %v270
        %v272 = vlaneseq
        %v273 = vshrl.u32 %v272, 7
        %v274 = vsub.s32 %v271, %v273
        %v275 = vrot.slane %v268, %v274
        %v277 = vmul.f32 %v264, %v275
        %279 = vset.pattern.permute.xlu0 0
        %280 = vperm.xlu0 %279, %v259
        %v281 = vpop.permute.xlu0 %280
        %v283 = vunpack.c.l.s4 839922192
        %v284 = vunpack.c.0.s8 %v283
        %v285 = vlaneseq
        %v286 = vshrl.u32 %v285, 7
        %v287 = vsub.s32 %v284, %v286
        %v288 = vrot.slane %v281, %v287
        %v290 = vadd.f32 %v277, %v288
        %291 = vst [vmem:[%s204] sm:$0xff] %v290
        %s292 = sand.u32 %s112, 1
        %s293 = scalar_lea.sflag [#allocation4], %s292
        %s294 = sand.u32 %s112, 1
        %s295 = smul.addr %s294, 8
        %s296 = scalar_lea.vmem [#allocation5], %s295
        // Predicated region
        $region37: #{tpu_custom_call.1} parent=31 // pred_check
          %p297 = pneg %p122
        $region38: #{tpu_custom_call.1} parent=31 // pred_check_branch
          %299 = sbr.rel (%p297) target = $region40
        $region39: #{tpu_custom_call.1} parent=31 // pred_region
          %s300 = smul.u32 2, %s25
          %s302 = ssub.s32 128, 128
          %303 = vsyncadd %s293, %s302
          %s304 = smul.addr %s24, 2
          %s305 = sadd.s32 %s300, %s304
          %s306 = smul.addr %s305, 64
          %s307 = scalar_lea.hbm %s3, %s306
          %s309 = sshll.u32 %s296, 4
          %s310 = int_to_ptr.vmem [resolvable:$true] %s309
          %312 = dma.vmem_to_hbm [thread:$0]  %s310, 128, %s307, %s293
        $region40: #{tpu_custom_call.1} parent=31 // pred_fallthru
          _
      $region32: #{tpu_custom_call.1} parent=5 // pred_fallthru
        _
      %p313 = scmp.le.s32.totalorder 2, %s15
      // Predicated region
      $region41: #{tpu_custom_call.1} parent=5 // pred_check
        %p314 = pneg %p313
      $region42: #{tpu_custom_call.1} parent=5 // pred_check_branch
        %316 = sbr.rel (%p314) target = $region44
      $region43: #{tpu_custom_call.1} parent=5 // pred_region
        %s317 = ssub.s32 %s15, 2
        // Predicated region
        $region45: #{tpu_custom_call.1} parent=43 // pred_check
          %p318 = pneg %p128
        $region46: #{tpu_custom_call.1} parent=43 // pred_check_branch
          %320 = sbr.rel (%p318) target = $region48
        $region47: #{tpu_custom_call.1} parent=43 // pred_region
          %s321 = sand.u32 %s113, 1
          %s322 = scalar_lea.sflag [#allocation4], %s321
          %s323 = sand.u32 %s113, 1
          %s324 = smul.addr %s323, 8
          %s325 = scalar_lea.vmem [#allocation5], %s324
          %326 = dma.done %s322, 128
        $region48: #{tpu_custom_call.1} parent=43 // pred_fallthru
          _
      $region44: #{tpu_custom_call.1} parent=5 // pred_fallthru
        _
    $region6: #{tpu_custom_call.1} parent=1 // loop_footer
      %s19 = sadd.s32 1, %s15
    $region7: #{tpu_custom_call.1} parent=1 // loop_footer_branch
      %14 = sbr.rel target = $region3
    $region8: #{tpu_custom_call.1} parent=1 // loop_exit
      _
    %327 = vsyncpa [#allocation3], 1
    %s328 = scalar_lea.sflag [#allocation3], 1
    %329 = vsyncpa %s328, 1
    %330 = vsyncpa [#allocation4], 1
    %s331 = scalar_lea.sflag [#allocation4], 1
    %332 = vsyncpa %s331, 1

</llo_original>
